<compile_context>
chip_gen: v7x
topology: tpu7x:2x2x1
jax: 0.10.0
libtpu: 0.0.40
codegen_flags: <defaults>
</compile_context>

<pallas_src>
import functools

import jax
import jax.numpy as jnp
from jax.experimental import pallas as pl
from jax.experimental.pallas import tpu as pltpu  # noqa: F401  (kept for TPU backend import)

EPS = 1e-5


def _bn_kernel(x_ref, gamma_ref, beta_ref, o_ref, *, n_true):
    # x_ref:     (C, NHW)  full slab
    # gamma_ref: (C, 1)
    # beta_ref:  (C, 1)
    inv_n = jnp.float32(1.0 / n_true)

    # ---- pass 1: one-pass per-channel statistics ----------------------------
    x = x_ref[...].astype(jnp.float32)
    s1 = jnp.sum(x, axis=1, keepdims=True)
    s2 = jnp.sum(x * x, axis=1, keepdims=True)
    mean = s1 * inv_n
    var = jnp.maximum(s2 * inv_n - mean * mean, 0.0)  # clamp for safety
    inv_std = jax.lax.rsqrt(var + EPS)

    # Fused per-channel scale/shift, computed once on (C, 1) values.
    scale = inv_std * gamma_ref[...]
    shift = beta_ref[...] - mean * scale

    # ---- pass 2: normalize (fresh read of x, 1 mul + 1 add per element) -----
    o_ref[...] = (x_ref[...].astype(jnp.float32) * scale + shift).astype(o_ref.dtype)


def batchnorm2d_pallas(x_nchw, gamma, beta):
    """BatchNorm2d forward using batch statistics (training mode, affine=True)."""
    N, C, H, W = x_nchw.shape
    nhw = N * H * W

    # Fold to (C, N*H*W).  For N == 1 this is a pure reshape (no copy).
    if N == 1:
        x2d = x_nchw.reshape(C, nhw)
    else:
        # TODO(synk): for N>1, fold the batch axis via a 3-D BlockSpec grid
        # instead of a materializing wrapper transpose.
        x2d = jnp.transpose(x_nchw, (1, 0, 2, 3)).reshape(C, nhw)

    g2d = gamma.reshape(C, 1).astype(jnp.float32)
    b2d = beta.reshape(C, 1).astype(jnp.float32)

    # Single invocation, whole arrays resident in VMEM (block == full array,
    # so the (8,128) divisibility rule is satisfied trivially).
    out2d = pl.pallas_call(
        functools.partial(_bn_kernel, n_true=nhw),
        out_shape=jax.ShapeDtypeStruct((C, nhw), x_nchw.dtype),
    )(x2d, g2d, b2d)

    if N == 1:
        return out2d.reshape(1, C, H, W)
    return jnp.transpose(out2d.reshape(C, N, H, W), (1, 0, 2, 3))


def batchnorm2d_ref(x_nchw, gamma, beta):
    mean = jnp.mean(x_nchw, axis=(0, 2, 3), keepdims=True)
    var = jnp.mean((x_nchw - mean) ** 2, axis=(0, 2, 3), keepdims=True)
    inv = jax.lax.rsqrt(var + EPS)
    return (x_nchw - mean) * inv * gamma.reshape(1, -1, 1, 1) + beta.reshape(1, -1, 1, 1)


if __name__ == "__main__":
    key = jax.random.PRNGKey(0)
    kx, kg, kb = jax.random.split(key, 3)

    N, C, H, W = 1, 192, 14, 14
    x = jax.random.normal(kx, (N, C, H, W), dtype=jnp.float32)

    # BatchNorm2d default init is weight=1, bias=0; perturb deterministically
    # so the affine path is exercised.
    gamma = 1.0 + 0.1 * jax.random.normal(kg, (C,), dtype=jnp.float32)
    beta = 0.1 * jax.random.normal(kb, (C,), dtype=jnp.float32)

    out = batchnorm2d_pallas(x, gamma, beta)
    out = jax.block_until_ready(out)

    ref = batchnorm2d_ref(x, gamma, beta)
    assert out.shape == (N, C, H, W)
    assert jnp.allclose(out, ref, atol=1e-4, rtol=1e-4)

    print("KERNEL_OK")
</pallas_src>

<mosaic_0001>
module attributes {stable_mosaic.version = 11 : i64} {
  func.func @_bn_kernel(%arg0: memref<192x196xf32, #tpu.memory_space<vmem>>, %arg1: memref<192x1xf32, #tpu.memory_space<vmem>>, %arg2: memref<192x1xf32, #tpu.memory_space<vmem>>, %arg3: memref<192x196xf32, #tpu.memory_space<vmem>>) attributes {dimension_semantics = [], scalar_prefetch = 0 : i64, scratch_operands = 0 : i64, tpu.core_type = #tpu.core_type<tc>} {
    %c0 = arith.constant 0 : index
    %c0_0 = arith.constant 0 : index
    %0 = vector.load %arg0[%c0, %c0_0] : memref<192x196xf32, #tpu.memory_space<vmem>>, vector<192x196xf32>
    %cst = arith.constant dense<0.000000e+00> : vector<192xf32>
    %1 = vector.multi_reduction <add>, %0, %cst [1] : vector<192x196xf32> to vector<192xf32>
    %2 = vector.shape_cast %1 : vector<192xf32> to vector<192x1xf32>
    %3 = arith.mulf %0, %0 : vector<192x196xf32>
    %cst_1 = arith.constant dense<0.000000e+00> : vector<192xf32>
    %4 = vector.multi_reduction <add>, %3, %cst_1 [1] : vector<192x196xf32> to vector<192xf32>
    %5 = vector.shape_cast %4 : vector<192xf32> to vector<192x1xf32>
    %cst_2 = arith.constant 0.00510204071 : f32
    %6 = vector.broadcast %cst_2 : f32 to vector<192x1xf32>
    %7 = arith.mulf %2, %6 : vector<192x1xf32>
    %cst_3 = arith.constant 0.00510204071 : f32
    %8 = vector.broadcast %cst_3 : f32 to vector<192x1xf32>
    %9 = arith.mulf %5, %8 : vector<192x1xf32>
    %10 = arith.mulf %7, %7 : vector<192x1xf32>
    %11 = arith.subf %9, %10 : vector<192x1xf32>
    %cst_4 = arith.constant 0.000000e+00 : f32
    %12 = vector.broadcast %cst_4 : f32 to vector<192x1xf32>
    %13 = arith.maximumf %11, %12 : vector<192x1xf32>
    %cst_5 = arith.constant 9.99999974E-6 : f32
    %14 = vector.broadcast %cst_5 : f32 to vector<192x1xf32>
    %15 = arith.addf %13, %14 : vector<192x1xf32>
    %16 = math.rsqrt %15 : vector<192x1xf32>
    %c0_6 = arith.constant 0 : index
    %c0_7 = arith.constant 0 : index
    %17 = vector.load %arg1[%c0_6, %c0_7] : memref<192x1xf32, #tpu.memory_space<vmem>>, vector<192x1xf32>
    %18 = arith.mulf %16, %17 : vector<192x1xf32>
    %c0_8 = arith.constant 0 : index
    %c0_9 = arith.constant 0 : index
    %19 = vector.load %arg2[%c0_8, %c0_9] : memref<192x1xf32, #tpu.memory_space<vmem>>, vector<192x1xf32>
    %20 = arith.mulf %7, %18 : vector<192x1xf32>
    %21 = arith.subf %19, %20 : vector<192x1xf32>
    %c0_10 = arith.constant 0 : index
    %c0_11 = arith.constant 0 : index
    %22 = vector.load %arg0[%c0_10, %c0_11] : memref<192x196xf32, #tpu.memory_space<vmem>>, vector<192x196xf32>
    %23 = vector.broadcast %18 : vector<192x1xf32> to vector<192x196xf32>
    %24 = arith.mulf %22, %23 : vector<192x196xf32>
    %25 = vector.broadcast %21 : vector<192x1xf32> to vector<192x196xf32>
    %26 = arith.addf %24, %25 : vector<192x196xf32>
    %c0_12 = arith.constant 0 : index
    %c0_13 = arith.constant 0 : index
    %27 = vector.load %arg3[%c0_12, %c0_13] : memref<192x196xf32, #tpu.memory_space<vmem>>, vector<192x196xf32>
    tpu.vector_store %arg3[%c0_12, %c0_13], %26 {strides = array<i32>} : memref<192x196xf32, #tpu.memory_space<vmem>>, vector<192x196xf32>,
    return
  }
}

</mosaic_0001>

<llo_original>
// kernel: tpu_custom_call.1
$region0: #{tpu_custom_call.1}
  #allocation0 [shape = 'u32[]', space=smem, size = 0x4, offset = 0x4, fixed_abs, tag = 'smem constant byte address 0x4 - core index']
  #allocation1 [shape = 'u32[144,128]{1,0:T(1,128)}', space=vmem, size = 0x12000, scoped, tag = 'internal scratch']
  %s0 = inlined_call_operand.vmem [shape: f32[192,196], index: 0, kind: input, shape index: {}]
  %s1 = inlined_call_operand.vmem [shape: f32[192,1], index: 1, kind: input, shape index: {}]
  %s2 = inlined_call_operand.vmem [shape: f32[192,1], index: 2, kind: input, shape index: {}]
  %s3 = inlined_call_operand.hbm [shape: f32[192,196], index: 3, kind: output, shape index: {}]
  %s4 = sld [smem:[#allocation0]]
  $region22: #{tpu_custom_call.1} parent=0
    _
  %s6 = ssub.s32 1, %s4
  %s7 = scalar_select 0, %s6, %s4
  $region1: #{tpu_custom_call.1} parent=0
    #allocation2 [shape = 'u8[196608]{0}', space=vmem, size = 0x30000, scoped, tag = 'output window, operand 0, single buffered']
    #allocation3 [shape = 's32[1]{0}', space=sflag, size = 0x4, scoped, tag = 'scoped memory for tpu_custom_call.1']
    %8 = vsyncpa [#allocation3], 0
    // Predicated region
    $region2: #{tpu_custom_call.1} parent=1 // pred_check
      _
    $region3: #{tpu_custom_call.1} parent=1 // pred_check_branch
      %10 = sbr.rel (0) target = $region5
    $region4: #{tpu_custom_call.1} parent=1 // pred_region
      _
    $region5: #{tpu_custom_call.1} parent=1 // pred_fallthru
      _
    // Predicated region
    $region6: #{tpu_custom_call.1} parent=1 // pred_check
      _
    $region7: #{tpu_custom_call.1} parent=1 // pred_check_branch
      %12 = sbr.rel (0) target = $region9
    $region8: #{tpu_custom_call.1} parent=1 // pred_region
      _
    $region9: #{tpu_custom_call.1} parent=1 // pred_fallthru
      _
    // Predicated region
    $region10: #{tpu_custom_call.1} parent=1 // pred_check
      _
    $region11: #{tpu_custom_call.1} parent=1 // pred_check_branch
      %14 = sbr.rel (0) target = $region13
    $region12: #{tpu_custom_call.1} parent=1 // pred_region
      _
    $region13: #{tpu_custom_call.1} parent=1 // pred_fallthru
      _
    %v15 = vld [vmem:[%s0] sm:$0xff]
    %v16 = vld [vmem:[%s0 + $0x8] sm:$0xff]
    %v17 = vld [vmem:[%s0 + $0x10] sm:$0xff]
    %v18 = vld [vmem:[%s0 + $0x18] sm:$0xff]
    %v19 = vld [vmem:[%s0 + $0x20] sm:$0xff]
    %v20 = vld [vmem:[%s0 + $0x28] sm:$0xff]
    %v21 = vld [vmem:[%s0 + $0x30] sm:$0xff]
    %v22 = vld [vmem:[%s0 + $0x38] sm:$0xff]
    %v23 = vld [vmem:[%s0 + $0x40] sm:$0xff]
    %v24 = vld [vmem:[%s0 + $0x48] sm:$0xff]
    %v25 = vld [vmem:[%s0 + $0x50] sm:$0xff]
    %v26 = vld [vmem:[%s0 + $0x58] sm:$0xff]
    %v27 = vld [vmem:[%s0 + $0x60] sm:$0xff]
    %v28 = vld [vmem:[%s0 + $0x68] sm:$0xff]
    %v29 = vld [vmem:[%s0 + $0x70] sm:$0xff]
    %v30 = vld [vmem:[%s0 + $0x78] sm:$0xff]
    %v31 = vld [vmem:[%s0 + $0x80] sm:$0xff]
    %v32 = vld [vmem:[%s0 + $0x88] sm:$0xff]
    %v33 = vld [vmem:[%s0 + $0x90] sm:$0xff]
    %v34 = vld [vmem:[%s0 + $0x98] sm:$0xff]
    %v35 = vld [vmem:[%s0 + $0xa0] sm:$0xff]
    %v36 = vld [vmem:[%s0 + $0xa8] sm:$0xff]
    %v37 = vld [vmem:[%s0 + $0xb0] sm:$0xff]
    %v38 = vld [vmem:[%s0 + $0xb8] sm:$0xff]
    %v39 = vld [vmem:[%s0 + $0xc0] sm:$0xff]
    %v40 = vld [vmem:[%s0 + $0xc8] sm:$0xff]
    %v41 = vld [vmem:[%s0 + $0xd0] sm:$0xff]
    %v42 = vld [vmem:[%s0 + $0xd8] sm:$0xff]
    %v43 = vld [vmem:[%s0 + $0xe0] sm:$0xff]
    %v44 = vld [vmem:[%s0 + $0xe8] sm:$0xff]
    %v45 = vld [vmem:[%s0 + $0xf0] sm:$0xff]
    %v46 = vld [vmem:[%s0 + $0xf8] sm:$0xff]
    %v47 = vld [vmem:[%s0 + $0x100] sm:$0xff]
    %v48 = vld [vmem:[%s0 + $0x108] sm:$0xff]
    %v49 = vld [vmem:[%s0 + $0x110] sm:$0xff]
    %v50 = vld [vmem:[%s0 + $0x118] sm:$0xff]
    %v51 = vld [vmem:[%s0 + $0x120] sm:$0xff]
    %v52 = vld [vmem:[%s0 + $0x128] sm:$0xff]
    %v53 = vld [vmem:[%s0 + $0x130] sm:$0xff]
    %v54 = vld [vmem:[%s0 + $0x138] sm:$0xff]
    %v55 = vld [vmem:[%s0 + $0x140] sm:$0xff]
    %v56 = vld [vmem:[%s0 + $0x148] sm:$0xff]
    %v57 = vld [vmem:[%s0 + $0x150] sm:$0xff]
    %v58 = vld [vmem:[%s0 + $0x158] sm:$0xff]
    %v59 = vld [vmem:[%s0 + $0x160] sm:$0xff]
    %v60 = vld [vmem:[%s0 + $0x168] sm:$0xff]
    %v61 = vld [vmem:[%s0 + $0x170] sm:$0xff]
    %v62 = vld [vmem:[%s0 + $0x178] sm:$0xff]
    %vm63 = vcmask 556032
    %v64 = vsel %vm63, %v16, 0.0
    %v65 = vadd.f32 %v15, %v64
    %66 = vadd.xlane.f32.xlu0 %v65
    %v67 = vpop.xlane.xlu0 %66
    %v68 = vsel %vm63, %v18, 0.0
    %v69 = vadd.f32 %v17, %v68
    %70 = vadd.xlane.f32.xlu0 %v69
    %v71 = vpop.xlane.xlu0 %70
    %v72 = vsel %vm63, %v20, 0.0
    %v73 = vadd.f32 %v19, %v72
    %74 = vadd.xlane.f32.xlu0 %v73
    %v75 = vpop.xlane.xlu0 %74
    %v76 = vsel %vm63, %v22, 0.0
    %v77 = vadd.f32 %v21, %v76
    %78 = vadd.xlane.f32.xlu0 %v77
    %v79 = vpop.xlane.xlu0 %78
    %v80 = vsel %vm63, %v24, 0.0
    %v81 = vadd.f32 %v23, %v80
    %82 = vadd.xlane.f32.xlu0 %v81
    %v83 = vpop.xlane.xlu0 %82
    %v84 = vsel %vm63, %v26, 0.0
    %v85 = vadd.f32 %v25, %v84
    %86 = vadd.xlane.f32.xlu0 %v85
    %v87 = vpop.xlane.xlu0 %86
    %v88 = vsel %vm63, %v28, 0.0
    %v89 = vadd.f32 %v27, %v88
    %90 = vadd.xlane.f32.xlu0 %v89
    %v91 = vpop.xlane.xlu0 %90
    %v92 = vsel %vm63, %v30, 0.0
    %v93 = vadd.f32 %v29, %v92
    %94 = vadd.xlane.f32.xlu0 %v93
    %v95 = vpop.xlane.xlu0 %94
    %v96 = vsel %vm63, %v32, 0.0
    %v97 = vadd.f32 %v31, %v96
    %98 = vadd.xlane.f32.xlu0 %v97
    %v99 = vpop.xlane.xlu0 %98
    %v100 = vsel %vm63, %v34, 0.0
    %v101 = vadd.f32 %v33, %v100
    %102 = vadd.xlane.f32.xlu0 %v101
    %v103 = vpop.xlane.xlu0 %102
    %v104 = vsel %vm63, %v36, 0.0
    %v105 = vadd.f32 %v35, %v104
    %106 = vadd.xlane.f32.xlu0 %v105
    %v107 = vpop.xlane.xlu0 %106
    %v108 = vsel %vm63, %v38, 0.0
    %v109 = vadd.f32 %v37, %v108
    %110 = vadd.xlane.f32.xlu0 %v109
    %v111 = vpop.xlane.xlu0 %110
    %v112 = vsel %vm63, %v40, 0.0
    %v113 = vadd.f32 %v39, %v112
    %114 = vadd.xlane.f32.xlu0 %v113
    %v115 = vpop.xlane.xlu0 %114
    %v116 = vsel %vm63, %v42, 0.0
    %v117 = vadd.f32 %v41, %v116
    %118 = vadd.xlane.f32.xlu0 %v117
    %v119 = vpop.xlane.xlu0 %118
    %v120 = vsel %vm63, %v44, 0.0
    %v121 = vadd.f32 %v43, %v120
    %122 = vadd.xlane.f32.xlu0 %v121
    %v123 = vpop.xlane.xlu0 %122
    %v124 = vsel %vm63, %v46, 0.0
    %v125 = vadd.f32 %v45, %v124
    %126 = vadd.xlane.f32.xlu0 %v125
    %v127 = vpop.xlane.xlu0 %126
    %v128 = vsel %vm63, %v48, 0.0
    %v129 = vadd.f32 %v47, %v128
    %130 = vadd.xlane.f32.xlu0 %v129
    %v131 = vpop.xlane.xlu0 %130
    %v132 = vsel %vm63, %v50, 0.0
    %v133 = vadd.f32 %v49, %v132
    %134 = vadd.xlane.f32.xlu0 %v133
    %v135 = vpop.xlane.xlu0 %134
    %v136 = vsel %vm63, %v52, 0.0
    %v137 = vadd.f32 %v51, %v136
    %138 = vadd.xlane.f32.xlu0 %v137
    %v139 = vpop.xlane.xlu0 %138
    %v140 = vsel %vm63, %v54, 0.0
    %v141 = vadd.f32 %v53, %v140
    %142 = vadd.xlane.f32.xlu0 %v141
    %v143 = vpop.xlane.xlu0 %142
    %v144 = vsel %vm63, %v56, 0.0
    %v145 = vadd.f32 %v55, %v144
    %146 = vadd.xlane.f32.xlu0 %v145
    %v147 = vpop.xlane.xlu0 %146
    %v148 = vsel %vm63, %v58, 0.0
    %v149 = vadd.f32 %v57, %v148
    %150 = vadd.xlane.f32.xlu0 %v149
    %v151 = vpop.xlane.xlu0 %150
    %v152 = vsel %vm63, %v60, 0.0
    %v153 = vadd.f32 %v59, %v152
    %154 = vadd.xlane.f32.xlu0 %v153
    %v155 = vpop.xlane.xlu0 %154
    %v156 = vsel %vm63, %v62, 0.0
    %v157 = vadd.f32 %v61, %v156
    %158 = vadd.xlane.f32.xlu0 %v157
    %v159 = vpop.xlane.xlu0 %158
    %v160 = vmul.f32 %v15, %v15
    %v161 = vmul.f32 %v16, %v16
    %v162 = vmul.f32 %v17, %v17
    %v163 = vmul.f32 %v18, %v18
    %v164 = vmul.f32 %v19, %v19
    %v165 = vmul.f32 %v20, %v20
    %v166 = vmul.f32 %v21, %v21
    %v167 = vmul.f32 %v22, %v22
    %v168 = vmul.f32 %v23, %v23
    %v169 = vmul.f32 %v24, %v24
    %v170 = vmul.f32 %v25, %v25
    %v171 = vmul.f32 %v26, %v26
    %v172 = vmul.f32 %v27, %v27
    %v173 = vmul.f32 %v28, %v28
    %v174 = vmul.f32 %v29, %v29
    %v175 = vmul.f32 %v30, %v30
    %v176 = vmul.f32 %v31, %v31
    %v177 = vmul.f32 %v32, %v32
    %v178 = vmul.f32 %v33, %v33
    %v179 = vmul.f32 %v34, %v34
    %v180 = vmul.f32 %v35, %v35
    %v181 = vmul.f32 %v36, %v36
    %v182 = vmul.f32 %v37, %v37
    %v183 = vmul.f32 %v38, %v38
    %v184 = vmul.f32 %v39, %v39
    %v185 = vmul.f32 %v40, %v40
    %v186 = vmul.f32 %v41, %v41
    %v187 = vmul.f32 %v42, %v42
    %v188 = vmul.f32 %v43, %v43
    %v189 = vmul.f32 %v44, %v44
    %v190 = vmul.f32 %v45, %v45
    %v191 = vmul.f32 %v46, %v46
    %v192 = vmul.f32 %v47, %v47
    %v193 = vmul.f32 %v48, %v48
    %v194 = vmul.f32 %v49, %v49
    %v195 = vmul.f32 %v50, %v50
    %v196 = vmul.f32 %v51, %v51
    %v197 = vmul.f32 %v52, %v52
    %v198 = vmul.f32 %v53, %v53
    %v199 = vmul.f32 %v54, %v54
    %v200 = vmul.f32 %v55, %v55
    %v201 = vmul.f32 %v56, %v56
    %v202 = vmul.f32 %v57, %v57
    %v203 = vmul.f32 %v58, %v58
    %v204 = vmul.f32 %v59, %v59
    %v205 = vmul.f32 %v60, %v60
    %v206 = vmul.f32 %v61, %v61
    %v207 = vmul.f32 %v62, %v62
    %v208 = vsel %vm63, %v161, 0.0
    %v209 = vadd.f32 %v160, %v208
    %210 = vadd.xlane.f32.xlu0 %v209
    %v211 = vpop.xlane.xlu0 %210
    %v212 = vsel %vm63, %v163, 0.0
    %v213 = vadd.f32 %v162, %v212
    %214 = vadd.xlane.f32.xlu0 %v213
    %v215 = vpop.xlane.xlu0 %214
    %v216 = vsel %vm63, %v165, 0.0
    %v217 = vadd.f32 %v164, %v216
    %218 = vadd.xlane.f32.xlu0 %v217
    %v219 = vpop.xlane.xlu0 %218
    %v220 = vsel %vm63, %v167, 0.0
    %v221 = vadd.f32 %v166, %v220
    %222 = vadd.xlane.f32.xlu0 %v221
    %v223 = vpop.xlane.xlu0 %222
    %v224 = vsel %vm63, %v169, 0.0
    %v225 = vadd.f32 %v168, %v224
    %226 = vadd.xlane.f32.xlu0 %v225
    %v227 = vpop.xlane.xlu0 %226
    %v228 = vsel %vm63, %v171, 0.0
    %v229 = vadd.f32 %v170, %v228
    %230 = vadd.xlane.f32.xlu0 %v229
    %v231 = vpop.xlane.xlu0 %230
    %v232 = vsel %vm63, %v173, 0.0
    %v233 = vadd.f32 %v172, %v232
    %234 = vadd.xlane.f32.xlu0 %v233
    %v235 = vpop.xlane.xlu0 %234
    %v236 = vsel %vm63, %v175, 0.0
    %v237 = vadd.f32 %v174, %v236
    %238 = vadd.xlane.f32.xlu0 %v237
    %v239 = vpop.xlane.xlu0 %238
    %v240 = vsel %vm63, %v177, 0.0
    %v241 = vadd.f32 %v176, %v240
    %242 = vadd.xlane.f32.xlu0 %v241
    %v243 = vpop.xlane.xlu0 %242
    %v244 = vsel %vm63, %v179, 0.0
    %v245 = vadd.f32 %v178, %v244
    %246 = vadd.xlane.f32.xlu0 %v245
    %v247 = vpop.xlane.xlu0 %246
    %v248 = vsel %vm63, %v181, 0.0
    %v249 = vadd.f32 %v180, %v248
    %250 = vadd.xlane.f32.xlu0 %v249
    %v251 = vpop.xlane.xlu0 %250
    %v252 = vsel %vm63, %v183, 0.0
    %v253 = vadd.f32 %v182, %v252
    %254 = vadd.xlane.f32.xlu0 %v253
    %v255 = vpop.xlane.xlu0 %254
    %v256 = vsel %vm63, %v185, 0.0
    %v257 = vadd.f32 %v184, %v256
    %258 = vadd.xlane.f32.xlu0 %v257
    %v259 = vpop.xlane.xlu0 %258
    %v260 = vsel %vm63, %v187, 0.0
    %v261 = vadd.f32 %v186, %v260
    %262 = vadd.xlane.f32.xlu0 %v261
    %v263 = vpop.xlane.xlu0 %262
    %v264 = vsel %vm63, %v189, 0.0
    %v265 = vadd.f32 %v188, %v264
    %266 = vadd.xlane.f32.xlu0 %v265
    %v267 = vpop.xlane.xlu0 %266
    %v268 = vsel %vm63, %v191, 0.0
    %v269 = vadd.f32 %v190, %v268
    %270 = vadd.xlane.f32.xlu0 %v269
    %v271 = vpop.xlane.xlu0 %270
    %v272 = vsel %vm63, %v193, 0.0
    %v273 = vadd.f32 %v192, %v272
    %274 = vadd.xlane.f32.xlu0 %v273
    %v275 = vpop.xlane.xlu0 %274
    %v276 = vsel %vm63, %v195, 0.0
    %v277 = vadd.f32 %v194, %v276
    %278 = vadd.xlane.f32.xlu0 %v277
    %v279 = vpop.xlane.xlu0 %278
    %v280 = vsel %vm63, %v197, 0.0
    %v281 = vadd.f32 %v196, %v280
    %282 = vadd.xlane.f32.xlu0 %v281
    %v283 = vpop.xlane.xlu0 %282
    %v284 = vsel %vm63, %v199, 0.0
    %v285 = vadd.f32 %v198, %v284
    %286 = vadd.xlane.f32.xlu0 %v285
    %v287 = vpop.xlane.xlu0 %286
    %v288 = vsel %vm63, %v201, 0.0
    %v289 = vadd.f32 %v200, %v288
    %290 = vadd.xlane.f32.xlu0 %v289
    %v291 = vpop.xlane.xlu0 %290
    %v292 = vsel %vm63, %v203, 0.0
    %v293 = vadd.f32 %v202, %v292
    %294 = vadd.xlane.f32.xlu0 %v293
    %v295 = vpop.xlane.xlu0 %294
    %v296 = vsel %vm63, %v205, 0.0
    %v297 = vadd.f32 %v204, %v296
    %298 = vadd.xlane.f32.xlu0 %v297
    %v299 = vpop.xlane.xlu0 %298
    %v300 = vsel %vm63, %v207, 0.0
    %v301 = vadd.f32 %v206, %v300
    %302 = vadd.xlane.f32.xlu0 %v301
    %v303 = vpop.xlane.xlu0 %302
    %v304 = vmul.f32 %v67, 0.0051020407
    %v305 = vmul.f32 %v71, 0.0051020407
    %v306 = vmul.f32 %v75, 0.0051020407
    %v307 = vmul.f32 %v79, 0.0051020407
    %v308 = vmul.f32 %v83, 0.0051020407
    %v309 = vmul.f32 %v87, 0.0051020407
    %v310 = vmul.f32 %v91, 0.0051020407
    %v311 = vmul.f32 %v95, 0.0051020407
    %v312 = vmul.f32 %v99, 0.0051020407
    %v313 = vmul.f32 %v103, 0.0051020407
    %v314 = vmul.f32 %v107, 0.0051020407
    %v315 = vmul.f32 %v111, 0.0051020407
    %v316 = vmul.f32 %v115, 0.0051020407
    %v317 = vmul.f32 %v119, 0.0051020407
    %v318 = vmul.f32 %v123, 0.0051020407
    %v319 = vmul.f32 %v127, 0.0051020407
    %v320 = vmul.f32 %v131, 0.0051020407
    %v321 = vmul.f32 %v135, 0.0051020407
    %v322 = vmul.f32 %v139, 0.0051020407
    %v323 = vmul.f32 %v143, 0.0051020407
    %v324 = vmul.f32 %v147, 0.0051020407
    %v325 = vmul.f32 %v151, 0.0051020407
    %v326 = vmul.f32 %v155, 0.0051020407
    %v327 = vmul.f32 %v159, 0.0051020407
    %v328 = vmul.f32 %v211, 0.0051020407
    %v329 = vmul.f32 %v215, 0.0051020407
    %v330 = vmul.f32 %v219, 0.0051020407
    %v331 = vmul.f32 %v223, 0.0051020407
    %v332 = vmul.f32 %v227, 0.0051020407
    %v333 = vmul.f32 %v231, 0.0051020407
    %v334 = vmul.f32 %v235, 0.0051020407
    %v335 = vmul.f32 %v239, 0.0051020407
    %v336 = vmul.f32 %v243, 0.0051020407
    %v337 = vmul.f32 %v247, 0.0051020407
    %v338 = vmul.f32 %v251, 0.0051020407
    %v339 = vmul.f32 %v255, 0.0051020407
    %v340 = vmul.f32 %v259, 0.0051020407
    %v341 = vmul.f32 %v263, 0.0051020407
    %v342 = vmul.f32 %v267, 0.0051020407
    %v343 = vmul.f32 %v271, 0.0051020407
    %v344 = vmul.f32 %v275, 0.0051020407
    %v345 = vmul.f32 %v279, 0.0051020407
    %v346 = vmul.f32 %v283, 0.0051020407
    %v347 = vmul.f32 %v287, 0.0051020407
    %v348 = vmul.f32 %v291, 0.0051020407
    %v349 = vmul.f32 %v295, 0.0051020407
    %v350 = vmul.f32 %v299, 0.0051020407
    %v351 = vmul.f32 %v303, 0.0051020407
    %v352 = vmul.f32 %v304, %v304
    %v353 = vmul.f32 %v305, %v305
    %v354 = vmul.f32 %v306, %v306
    %v355 = vmul.f32 %v307, %v307
    %v356 = vmul.f32 %v308, %v308
    %v357 = vmul.f32 %v309, %v309
    %v358 = vmul.f32 %v310, %v310
    %v359 = vmul.f32 %v311, %v311
    %v360 = vmul.f32 %v312, %v312
    %v361 = vmul.f32 %v313, %v313
    %v362 = vmul.f32 %v314, %v314
    %v363 = vmul.f32 %v315, %v315
    %v364 = vmul.f32 %v316, %v316
    %v365 = vmul.f32 %v317, %v317
    %v366 = vmul.f32 %v318, %v318
    %v367 = vmul.f32 %v319, %v319
    %v368 = vmul.f32 %v320, %v320
    %v369 = vmul.f32 %v321, %v321
    %v370 = vmul.f32 %v322, %v322
    %v371 = vmul.f32 %v323, %v323
    %v372 = vmul.f32 %v324, %v324
    %v373 = vmul.f32 %v325, %v325
    %v374 = vmul.f32 %v326, %v326
    %v375 = vmul.f32 %v327, %v327
    %v376 = vsub.f32 %v328, %v352
    %v377 = vsub.f32 %v329, %v353
    %v378 = vsub.f32 %v330, %v354
    %v379 = vsub.f32 %v331, %v355
    %v380 = vsub.f32 %v332, %v356
    %v381 = vsub.f32 %v333, %v357
    %v382 = vsub.f32 %v334, %v358
    %v383 = vsub.f32 %v335, %v359
    %v384 = vsub.f32 %v336, %v360
    %v385 = vsub.f32 %v337, %v361
    %v386 = vsub.f32 %v338, %v362
    %v387 = vsub.f32 %v339, %v363
    %v388 = vsub.f32 %v340, %v364
    %v389 = vsub.f32 %v341, %v365
    %v390 = vsub.f32 %v342, %v366
    %v391 = vsub.f32 %v343, %v367
    %v392 = vsub.f32 %v344, %v368
    %v393 = vsub.f32 %v345, %v369
    %v394 = vsub.f32 %v346, %v370
    %v395 = vsub.f32 %v347, %v371
    %v396 = vsub.f32 %v348, %v372
    %v397 = vsub.f32 %v349, %v373
    %v398 = vsub.f32 %v350, %v374
    %v399 = vsub.f32 %v351, %v375
    %v400 = vmax.f32 %v376, 0.0
    %v401 = vmax.f32 %v377, 0.0
    %v402 = vmax.f32 %v378, 0.0
    %v403 = vmax.f32 %v379, 0.0
    %v404 = vmax.f32 %v380, 0.0
    %v405 = vmax.f32 %v381, 0.0
    %v406 = vmax.f32 %v382, 0.0
    %v407 = vmax.f32 %v383, 0.0
    %v408 = vmax.f32 %v384, 0.0
    %v409 = vmax.f32 %v385, 0.0
    %v410 = vmax.f32 %v386, 0.0
    %v411 = vmax.f32 %v387, 0.0
    %v412 = vmax.f32 %v388, 0.0
    %v413 = vmax.f32 %v389, 0.0
    %v414 = vmax.f32 %v390, 0.0
    %v415 = vmax.f32 %v391, 0.0
    %v416 = vmax.f32 %v392, 0.0
    %v417 = vmax.f32 %v393, 0.0
    %v418 = vmax.f32 %v394, 0.0
    %v419 = vmax.f32 %v395, 0.0
    %v420 = vmax.f32 %v396, 0.0
    %v421 = vmax.f32 %v397, 0.0
    %v422 = vmax.f32 %v398, 0.0
    %v423 = vmax.f32 %v399, 0.0
    %v424 = vadd.f32 %v400, 1e-05
    %v425 = vadd.f32 %v401, 1e-05
    %v426 = vadd.f32 %v402, 1e-05
    %v427 = vadd.f32 %v403, 1e-05
    %v428 = vadd.f32 %v404, 1e-05
    %v429 = vadd.f32 %v405, 1e-05
    %v430 = vadd.f32 %v406, 1e-05
    %v431 = vadd.f32 %v407, 1e-05
    %v432 = vadd.f32 %v408, 1e-05
    %v433 = vadd.f32 %v409, 1e-05
    %v434 = vadd.f32 %v410, 1e-05
    %v435 = vadd.f32 %v411, 1e-05
    %v436 = vadd.f32 %v412, 1e-05
    %v437 = vadd.f32 %v413, 1e-05
    %v438 = vadd.f32 %v414, 1e-05
    %v439 = vadd.f32 %v415, 1e-05
    %v440 = vadd.f32 %v416, 1e-05
    %v441 = vadd.f32 %v417, 1e-05
    %v442 = vadd.f32 %v418, 1e-05
    %v443 = vadd.f32 %v419, 1e-05
    %v444 = vadd.f32 %v420, 1e-05
    %v445 = vadd.f32 %v421, 1e-05
    %v446 = vadd.f32 %v422, 1e-05
    %v447 = vadd.f32 %v423, 1e-05
    %v448 = vrsqrt.pop %v424
    %v449 = vrsqrt.pop %v425
    %v450 = vrsqrt.pop %v426
    %v451 = vrsqrt.pop %v427
    %v452 = vrsqrt.pop %v428
    %v453 = vrsqrt.pop %v429
    %v454 = vrsqrt.pop %v430
    %v455 = vrsqrt.pop %v431
    %v456 = vrsqrt.pop %v432
    %v457 = vrsqrt.pop %v433
    %v458 = vrsqrt.pop %v434
    %v459 = vrsqrt.pop %v435
    %v460 = vrsqrt.pop %v436
    %v461 = vrsqrt.pop %v437
    %v462 = vrsqrt.pop %v438
    %v463 = vrsqrt.pop %v439
    %v464 = vrsqrt.pop %v440
    %v465 = vrsqrt.pop %v441
    %v466 = vrsqrt.pop %v442
    %v467 = vrsqrt.pop %v443
    %v468 = vrsqrt.pop %v444
    %v469 = vrsqrt.pop %v445
    %v470 = vrsqrt.pop %v446
    %v471 = vrsqrt.pop %v447
    %v472 = vld [vmem:[%s1] sm:$0xff]
    %v473 = vld [vmem:[%s1 + $0x8] sm:$0xff]
    %v474 = vld [vmem:[%s1 + $0x10] sm:$0xff]
    %v475 = vld [vmem:[%s1 + $0x18] sm:$0xff]
    %v476 = vld [vmem:[%s1 + $0x20] sm:$0xff]
    %v477 = vld [vmem:[%s1 + $0x28] sm:$0xff]
    %v478 = vld [vmem:[%s1 + $0x30] sm:$0xff]
    %v479 = vld [vmem:[%s1 + $0x38] sm:$0xff]
    %v480 = vld [vmem:[%s1 + $0x40] sm:$0xff]
    %v481 = vld [vmem:[%s1 + $0x48] sm:$0xff]
    %v482 = vld [vmem:[%s1 + $0x50] sm:$0xff]
    %v483 = vld [vmem:[%s1 + $0x58] sm:$0xff]
    %v484 = vld [vmem:[%s1 + $0x60] sm:$0xff]
    %v485 = vld [vmem:[%s1 + $0x68] sm:$0xff]
    %v486 = vld [vmem:[%s1 + $0x70] sm:$0xff]
    %v487 = vld [vmem:[%s1 + $0x78] sm:$0xff]
    %v488 = vld [vmem:[%s1 + $0x80] sm:$0xff]
    %v489 = vld [vmem:[%s1 + $0x88] sm:$0xff]
    %v490 = vld [vmem:[%s1 + $0x90] sm:$0xff]
    %v491 = vld [vmem:[%s1 + $0x98] sm:$0xff]
    %v492 = vld [vmem:[%s1 + $0xa0] sm:$0xff]
    %v493 = vld [vmem:[%s1 + $0xa8] sm:$0xff]
    %v494 = vld [vmem:[%s1 + $0xb0] sm:$0xff]
    %v495 = vld [vmem:[%s1 + $0xb8] sm:$0xff]
    %v496 = vmul.f32 %v448, %v472
    %v497 = vmul.f32 %v449, %v473
    %v498 = vmul.f32 %v450, %v474
    %v499 = vmul.f32 %v451, %v475
    %v500 = vmul.f32 %v452, %v476
    %v501 = vmul.f32 %v453, %v477
    %v502 = vmul.f32 %v454, %v478
    %v503 = vmul.f32 %v455, %v479
    %v504 = vmul.f32 %v456, %v480
    %v505 = vmul.f32 %v457, %v481
    %v506 = vmul.f32 %v458, %v482
    %v507 = vmul.f32 %v459, %v483
    %v508 = vmul.f32 %v460, %v484
    %v509 = vmul.f32 %v461, %v485
    %v510 = vmul.f32 %v462, %v486
    %v511 = vmul.f32 %v463, %v487
    %v512 = vmul.f32 %v464, %v488
    %v513 = vmul.f32 %v465, %v489
    %v514 = vmul.f32 %v466, %v490
    %v515 = vmul.f32 %v467, %v491
    %v516 = vmul.f32 %v468, %v492
    %v517 = vmul.f32 %v469, %v493
    %v518 = vmul.f32 %v470, %v494
    %v519 = vmul.f32 %v471, %v495
    %v520 = vld [vmem:[%s2] sm:$0xff]
    %v521 = vld [vmem:[%s2 + $0x8] sm:$0xff]
    %v522 = vld [vmem:[%s2 + $0x10] sm:$0xff]
    %v523 = vld [vmem:[%s2 + $0x18] sm:$0xff]
    %v524 = vld [vmem:[%s2 + $0x20] sm:$0xff]
    %v525 = vld [vmem:[%s2 + $0x28] sm:$0xff]
    %v526 = vld [vmem:[%s2 + $0x30] sm:$0xff]
    %v527 = vld [vmem:[%s2 + $0x38] sm:$0xff]
    %v528 = vld [vmem:[%s2 + $0x40] sm:$0xff]
    %v529 = vld [vmem:[%s2 + $0x48] sm:$0xff]
    %v530 = vld [vmem:[%s2 + $0x50] sm:$0xff]
    %v531 = vld [vmem:[%s2 + $0x58] sm:$0xff]
    %v532 = vld [vmem:[%s2 + $0x60] sm:$0xff]
    %v533 = vld [vmem:[%s2 + $0x68] sm:$0xff]
    %v534 = vld [vmem:[%s2 + $0x70] sm:$0xff]
    %v535 = vld [vmem:[%s2 + $0x78] sm:$0xff]
    %v536 = vld [vmem:[%s2 + $0x80] sm:$0xff]
    %v537 = vld [vmem:[%s2 + $0x88] sm:$0xff]
    %v538 = vld [vmem:[%s2 + $0x90] sm:$0xff]
    %v539 = vld [vmem:[%s2 + $0x98] sm:$0xff]
    %v540 = vld [vmem:[%s2 + $0xa0] sm:$0xff]
    %v541 = vld [vmem:[%s2 + $0xa8] sm:$0xff]
    %v542 = vld [vmem:[%s2 + $0xb0] sm:$0xff]
    %v543 = vld [vmem:[%s2 + $0xb8] sm:$0xff]
    %v544 = vmul.f32 %v304, %v496
    %v545 = vmul.f32 %v305, %v497
    %v546 = vmul.f32 %v306, %v498
    %v547 = vmul.f32 %v307, %v499
    %v548 = vmul.f32 %v308, %v500
    %v549 = vmul.f32 %v309, %v501
    %v550 = vmul.f32 %v310, %v502
    %v551 = vmul.f32 %v311, %v503
    %v552 = vmul.f32 %v312, %v504
    %v553 = vmul.f32 %v313, %v505
    %v554 = vmul.f32 %v314, %v506
    %v555 = vmul.f32 %v315, %v507
    %v556 = vmul.f32 %v316, %v508
    %v557 = vmul.f32 %v317, %v509
    %v558 = vmul.f32 %v318, %v510
    %v559 = vmul.f32 %v319, %v511
    %v560 = vmul.f32 %v320, %v512
    %v561 = vmul.f32 %v321, %v513
    %v562 = vmul.f32 %v322, %v514
    %v563 = vmul.f32 %v323, %v515
    %v564 = vmul.f32 %v324, %v516
    %v565 = vmul.f32 %v325, %v517
    %v566 = vmul.f32 %v326, %v518
    %v567 = vmul.f32 %v327, %v519
    %v568 = vsub.f32 %v520, %v544
    %v569 = vsub.f32 %v521, %v545
    %v570 = vsub.f32 %v522, %v546
    %v571 = vsub.f32 %v523, %v547
    %v572 = vsub.f32 %v524, %v548
    %v573 = vsub.f32 %v525, %v549
    %v574 = vsub.f32 %v526, %v550
    %v575 = vsub.f32 %v527, %v551
    %v576 = vsub.f32 %v528, %v552
    %v577 = vsub.f32 %v529, %v553
    %v578 = vsub.f32 %v530, %v554
    %v579 = vsub.f32 %v531, %v555
    %v580 = vsub.f32 %v532, %v556
    %v581 = vsub.f32 %v533, %v557
    %v582 = vsub.f32 %v534, %v558
    %v583 = vsub.f32 %v535, %v559
    %v584 = vsub.f32 %v536, %v560
    %v585 = vsub.f32 %v537, %v561
    %v586 = vsub.f32 %v538, %v562
    %v587 = vsub.f32 %v539, %v563
    %v588 = vsub.f32 %v540, %v564
    %v589 = vsub.f32 %v541, %v565
    %v590 = vsub.f32 %v542, %v566
    %v591 = vsub.f32 %v543, %v567
    %593 = vset.pattern.permute.xlu0 0
    %594 = vperm.xlu0 %593, %v496
    %v595 = vpop.permute.xlu0 %594
    %598 = vset.pattern.permute.xlu0 0
    %599 = vperm.xlu0 %598, %v497
    %v600 = vpop.permute.xlu0 %599
    %603 = vset.pattern.permute.xlu0 0
    %604 = vperm.xlu0 %603, %v498
    %v605 = vpop.permute.xlu0 %604
    %608 = vset.pattern.permute.xlu0 0
    %609 = vperm.xlu0 %608, %v499
    %v610 = vpop.permute.xlu0 %609
    %613 = vset.pattern.permute.xlu0 0
    %614 = vperm.xlu0 %613, %v500
    %v615 = vpop.permute.xlu0 %614
    %618 = vset.pattern.permute.xlu0 0
    %619 = vperm.xlu0 %618, %v501
    %v620 = vpop.permute.xlu0 %619
    %623 = vset.pattern.permute.xlu0 0
    %624 = vperm.xlu0 %623, %v502
    %v625 = vpop.permute.xlu0 %624
    %628 = vset.pattern.permute.xlu0 0
    %629 = vperm.xlu0 %628, %v503
    %v630 = vpop.permute.xlu0 %629
    %633 = vset.pattern.permute.xlu0 0
    %634 = vperm.xlu0 %633, %v504
    %v635 = vpop.permute.xlu0 %634
    %638 = vset.pattern.permute.xlu0 0
    %639 = vperm.xlu0 %638, %v505
    %v640 = vpop.permute.xlu0 %639
    %643 = vset.pattern.permute.xlu0 0
    %644 = vperm.xlu0 %643, %v506
    %v645 = vpop.permute.xlu0 %644
    %648 = vset.pattern.permute.xlu0 0
    %649 = vperm.xlu0 %648, %v507
    %v650 = vpop.permute.xlu0 %649
    %653 = vset.pattern.permute.xlu0 0
    %654 = vperm.xlu0 %653, %v508
    %v655 = vpop.permute.xlu0 %654
    %658 = vset.pattern.permute.xlu0 0
    %659 = vperm.xlu0 %658, %v509
    %v660 = vpop.permute.xlu0 %659
    %663 = vset.pattern.permute.xlu0 0
    %664 = vperm.xlu0 %663, %v510
    %v665 = vpop.permute.xlu0 %664
    %668 = vset.pattern.permute.xlu0 0
    %669 = vperm.xlu0 %668, %v511
    %v670 = vpop.permute.xlu0 %669
    %673 = vset.pattern.permute.xlu0 0
    %674 = vperm.xlu0 %673, %v512
    %v675 = vpop.permute.xlu0 %674
    %678 = vset.pattern.permute.xlu0 0
    %679 = vperm.xlu0 %678, %v513
    %v680 = vpop.permute.xlu0 %679
    %683 = vset.pattern.permute.xlu0 0
    %684 = vperm.xlu0 %683, %v514
    %v685 = vpop.permute.xlu0 %684
    %688 = vset.pattern.permute.xlu0 0
    %689 = vperm.xlu0 %688, %v515
    %v690 = vpop.permute.xlu0 %689
    %693 = vset.pattern.permute.xlu0 0
    %694 = vperm.xlu0 %693, %v516
    %v695 = vpop.permute.xlu0 %694
    %698 = vset.pattern.permute.xlu0 0
    %699 = vperm.xlu0 %698, %v517
    %v700 = vpop.permute.xlu0 %699
    %703 = vset.pattern.permute.xlu0 0
    %704 = vperm.xlu0 %703, %v518
    %v705 = vpop.permute.xlu0 %704
    %708 = vset.pattern.permute.xlu0 0
    %709 = vperm.xlu0 %708, %v519
    %v710 = vpop.permute.xlu0 %709
    %v712 = vmul.f32 %v15, %v595
    %v713 = vmul.f32 %v16, %v595
    %v714 = vmul.f32 %v17, %v600
    %v715 = vmul.f32 %v18, %v600
    %v716 = vmul.f32 %v19, %v605
    %v717 = vmul.f32 %v20, %v605
    %v718 = vmul.f32 %v21, %v610
    %v719 = vmul.f32 %v22, %v610
    %v720 = vmul.f32 %v23, %v615
    %v721 = vmul.f32 %v24, %v615
    %v722 = vmul.f32 %v25, %v620
    %v723 = vmul.f32 %v26, %v620
    %v724 = vmul.f32 %v27, %v625
    %v725 = vmul.f32 %v28, %v625
    %v726 = vmul.f32 %v29, %v630
    %v727 = vmul.f32 %v30, %v630
    %v728 = vmul.f32 %v31, %v635
    %v729 = vmul.f32 %v32, %v635
    %v730 = vmul.f32 %v33, %v640
    %v731 = vmul.f32 %v34, %v640
    %v732 = vmul.f32 %v35, %v645
    %v733 = vmul.f32 %v36, %v645
    %v734 = vmul.f32 %v37, %v650
    %v735 = vmul.f32 %v38, %v650
    %v736 = vmul.f32 %v39, %v655
    %v737 = vmul.f32 %v40, %v655
    %v738 = vmul.f32 %v41, %v660
    %v739 = vmul.f32 %v42, %v660
    %v740 = vmul.f32 %v43, %v665
    %v741 = vmul.f32 %v44, %v665
    %v742 = vmul.f32 %v45, %v670
    %v743 = vmul.f32 %v46, %v670
    %v744 = vmul.f32 %v47, %v675
    %v745 = vmul.f32 %v48, %v675
    %v746 = vmul.f32 %v49, %v680
    %v747 = vmul.f32 %v50, %v680
    %v748 = vmul.f32 %v51, %v685
    %v749 = vmul.f32 %v52, %v685
    %v750 = vmul.f32 %v53, %v690
    %v751 = vmul.f32 %v54, %v690
    %v752 = vmul.f32 %v55, %v695
    %v753 = vmul.f32 %v56, %v695
    %v754 = vmul.f32 %v57, %v700
    %v755 = vmul.f32 %v58, %v700
    %v756 = vmul.f32 %v59, %v705
    %v757 = vmul.f32 %v60, %v705
    %v758 = vmul.f32 %v61, %v710
    %v759 = vmul.f32 %v62, %v710
    %761 = vset.pattern.permute.xlu0 0
    %762 = vperm.xlu0 %761, %v568
    %v763 = vpop.permute.xlu0 %762
    %766 = vset.pattern.permute.xlu0 0
    %767 = vperm.xlu0 %766, %v569
    %v768 = vpop.permute.xlu0 %767
    %771 = vset.pattern.permute.xlu0 0
    %772 = vperm.xlu0 %771, %v570
    %v773 = vpop.permute.xlu0 %772
    %776 = vset.pattern.permute.xlu0 0
    %777 = vperm.xlu0 %776, %v571
    %v778 = vpop.permute.xlu0 %777
    %781 = vset.pattern.permute.xlu0 0
    %782 = vperm.xlu0 %781, %v572
    %v783 = vpop.permute.xlu0 %782
    %786 = vset.pattern.permute.xlu0 0
    %787 = vperm.xlu0 %786, %v573
    %v788 = vpop.permute.xlu0 %787
    %791 = vset.pattern.permute.xlu0 0
    %792 = vperm.xlu0 %791, %v574
    %v793 = vpop.permute.xlu0 %792
    %796 = vset.pattern.permute.xlu0 0
    %797 = vperm.xlu0 %796, %v575
    %v798 = vpop.permute.xlu0 %797
    %801 = vset.pattern.permute.xlu0 0
    %802 = vperm.xlu0 %801, %v576
    %v803 = vpop.permute.xlu0 %802
    %806 = vset.pattern.permute.xlu0 0
    %807 = vperm.xlu0 %806, %v577
    %v808 = vpop.permute.xlu0 %807
    %811 = vset.pattern.permute.xlu0 0
    %812 = vperm.xlu0 %811, %v578
    %v813 = vpop.permute.xlu0 %812
    %816 = vset.pattern.permute.xlu0 0
    %817 = vperm.xlu0 %816, %v579
    %v818 = vpop.permute.xlu0 %817
    %821 = vset.pattern.permute.xlu0 0
    %822 = vperm.xlu0 %821, %v580
    %v823 = vpop.permute.xlu0 %822
    %826 = vset.pattern.permute.xlu0 0
    %827 = vperm.xlu0 %826, %v581
    %v828 = vpop.permute.xlu0 %827
    %831 = vset.pattern.permute.xlu0 0
    %832 = vperm.xlu0 %831, %v582
    %v833 = vpop.permute.xlu0 %832
    %836 = vset.pattern.permute.xlu0 0
    %837 = vperm.xlu0 %836, %v583
    %v838 = vpop.permute.xlu0 %837
    %841 = vset.pattern.permute.xlu0 0
    %842 = vperm.xlu0 %841, %v584
    %v843 = vpop.permute.xlu0 %842
    %846 = vset.pattern.permute.xlu0 0
    %847 = vperm.xlu0 %846, %v585
    %v848 = vpop.permute.xlu0 %847
    %851 = vset.pattern.permute.xlu0 0
    %852 = vperm.xlu0 %851, %v586
    %v853 = vpop.permute.xlu0 %852
    %856 = vset.pattern.permute.xlu0 0
    %857 = vperm.xlu0 %856, %v587
    %v858 = vpop.permute.xlu0 %857
    %861 = vset.pattern.permute.xlu0 0
    %862 = vperm.xlu0 %861, %v588
    %v863 = vpop.permute.xlu0 %862
    %866 = vset.pattern.permute.xlu0 0
    %867 = vperm.xlu0 %866, %v589
    %v868 = vpop.permute.xlu0 %867
    %871 = vset.pattern.permute.xlu0 0
    %872 = vperm.xlu0 %871, %v590
    %v873 = vpop.permute.xlu0 %872
    %876 = vset.pattern.permute.xlu0 0
    %877 = vperm.xlu0 %876, %v591
    %v878 = vpop.permute.xlu0 %877
    %v880 = vadd.f32 %v712, %v763
    %v881 = vadd.f32 %v713, %v763
    %v882 = vadd.f32 %v714, %v768
    %v883 = vadd.f32 %v715, %v768
    %v884 = vadd.f32 %v716, %v773
    %v885 = vadd.f32 %v717, %v773
    %v886 = vadd.f32 %v718, %v778
    %v887 = vadd.f32 %v719, %v778
    %v888 = vadd.f32 %v720, %v783
    %v889 = vadd.f32 %v721, %v783
    %v890 = vadd.f32 %v722, %v788
    %v891 = vadd.f32 %v723, %v788
    %v892 = vadd.f32 %v724, %v793
    %v893 = vadd.f32 %v725, %v793
    %v894 = vadd.f32 %v726, %v798
    %v895 = vadd.f32 %v727, %v798
    %v896 = vadd.f32 %v728, %v803
    %v897 = vadd.f32 %v729, %v803
    %v898 = vadd.f32 %v730, %v808
    %v899 = vadd.f32 %v731, %v808
    %v900 = vadd.f32 %v732, %v813
    %v901 = vadd.f32 %v733, %v813
    %v902 = vadd.f32 %v734, %v818
    %v903 = vadd.f32 %v735, %v818
    %v904 = vadd.f32 %v736, %v823
    %v905 = vadd.f32 %v737, %v823
    %v906 = vadd.f32 %v738, %v828
    %v907 = vadd.f32 %v739, %v828
    %v908 = vadd.f32 %v740, %v833
    %v909 = vadd.f32 %v741, %v833
    %v910 = vadd.f32 %v742, %v838
    %v911 = vadd.f32 %v743, %v838
    %v912 = vadd.f32 %v744, %v843
    %v913 = vadd.f32 %v745, %v843
    %v914 = vadd.f32 %v746, %v848
    %v915 = vadd.f32 %v747, %v848
    %v916 = vadd.f32 %v748, %v853
    %v917 = vadd.f32 %v749, %v853
    %v918 = vadd.f32 %v750, %v858
    %v919 = vadd.f32 %v751, %v858
    %v920 = vadd.f32 %v752, %v863
    %v921 = vadd.f32 %v753, %v863
    %v922 = vadd.f32 %v754, %v868
    %v923 = vadd.f32 %v755, %v868
    %v924 = vadd.f32 %v756, %v873
    %v925 = vadd.f32 %v757, %v873
    %v926 = vadd.f32 %v758, %v878
    %v927 = vadd.f32 %v759, %v878
    %928 = vst [vmem:[#allocation2] sm:$0xff] %v880
    %929 = vst.msk [vmem:[#allocation2 + $0x8] sm:$0xff] %vm63, %v881
    %930 = vst [vmem:[#allocation2 + $0x10] sm:$0xff] %v882
    %931 = vst.msk [vmem:[#allocation2 + $0x18] sm:$0xff] %vm63, %v883
    %932 = vst [vmem:[#allocation2 + $0x20] sm:$0xff] %v884
    %933 = vst.msk [vmem:[#allocation2 + $0x28] sm:$0xff] %vm63, %v885
    %934 = vst [vmem:[#allocation2 + $0x30] sm:$0xff] %v886
    %935 = vst.msk [vmem:[#allocation2 + $0x38] sm:$0xff] %vm63, %v887
    %936 = vst [vmem:[#allocation2 + $0x40] sm:$0xff] %v888
    %937 = vst.msk [vmem:[#allocation2 + $0x48] sm:$0xff] %vm63, %v889
    %938 = vst [vmem:[#allocation2 + $0x50] sm:$0xff] %v890
    %939 = vst.msk [vmem:[#allocation2 + $0x58] sm:$0xff] %vm63, %v891
    %940 = vst [vmem:[#allocation2 + $0x60] sm:$0xff] %v892
    %941 = vst.msk [vmem:[#allocation2 + $0x68] sm:$0xff] %vm63, %v893
    %942 = vst [vmem:[#allocation2 + $0x70] sm:$0xff] %v894
    %943 = vst.msk [vmem:[#allocation2 + $0x78] sm:$0xff] %vm63, %v895
    %944 = vst [vmem:[#allocation2 + $0x80] sm:$0xff] %v896
    %945 = vst.msk [vmem:[#allocation2 + $0x88] sm:$0xff] %vm63, %v897
    %946 = vst [vmem:[#allocation2 + $0x90] sm:$0xff] %v898
    %947 = vst.msk [vmem:[#allocation2 + $0x98] sm:$0xff] %vm63, %v899
    %948 = vst [vmem:[#allocation2 + $0xa0] sm:$0xff] %v900
    %949 = vst.msk [vmem:[#allocation2 + $0xa8] sm:$0xff] %vm63, %v901
    %950 = vst [vmem:[#allocation2 + $0xb0] sm:$0xff] %v902
    %951 = vst.msk [vmem:[#allocation2 + $0xb8] sm:$0xff] %vm63, %v903
    %952 = vst [vmem:[#allocation2 + $0xc0] sm:$0xff] %v904
    %953 = vst.msk [vmem:[#allocation2 + $0xc8] sm:$0xff] %vm63, %v905
    %954 = vst [vmem:[#allocation2 + $0xd0] sm:$0xff] %v906
    %955 = vst.msk [vmem:[#allocation2 + $0xd8] sm:$0xff] %vm63, %v907
    %956 = vst [vmem:[#allocation2 + $0xe0] sm:$0xff] %v908
    %957 = vst.msk [vmem:[#allocation2 + $0xe8] sm:$0xff] %vm63, %v909
    %958 = vst [vmem:[#allocation2 + $0xf0] sm:$0xff] %v910
    %959 = vst.msk [vmem:[#allocation2 + $0xf8] sm:$0xff] %vm63, %v911
    %960 = vst [vmem:[#allocation2 + $0x100] sm:$0xff] %v912
    %961 = vst.msk [vmem:[#allocation2 + $0x108] sm:$0xff] %vm63, %v913
    %962 = vst [vmem:[#allocation2 + $0x110] sm:$0xff] %v914
    %963 = vst.msk [vmem:[#allocation2 + $0x118] sm:$0xff] %vm63, %v915
    %964 = vst [vmem:[#allocation2 + $0x120] sm:$0xff] %v916
    %965 = vst.msk [vmem:[#allocation2 + $0x128] sm:$0xff] %vm63, %v917
    %966 = vst [vmem:[#allocation2 + $0x130] sm:$0xff] %v918
    %967 = vst.msk [vmem:[#allocation2 + $0x138] sm:$0xff] %vm63, %v919
    %968 = vst [vmem:[#allocation2 + $0x140] sm:$0xff] %v920
    %969 = vst.msk [vmem:[#allocation2 + $0x148] sm:$0xff] %vm63, %v921
    %970 = vst [vmem:[#allocation2 + $0x150] sm:$0xff] %v922
    %971 = vst.msk [vmem:[#allocation2 + $0x158] sm:$0xff] %vm63, %v923
    %972 = vst [vmem:[#allocation2 + $0x160] sm:$0xff] %v924
    %973 = vst.msk [vmem:[#allocation2 + $0x168] sm:$0xff] %vm63, %v925
    %974 = vst [vmem:[#allocation2 + $0x170] sm:$0xff] %v926
    %975 = vst.msk [vmem:[#allocation2 + $0x178] sm:$0xff] %vm63, %v927
    // Predicated region
    $region14: #{tpu_custom_call.1} parent=1 // pred_check
      _
    $region15: #{tpu_custom_call.1} parent=1 // pred_check_branch
      %977 = sbr.rel (0) target = $region17
    $region16: #{tpu_custom_call.1} parent=1 // pred_region
      %s979 = ssub.s32 6144, 6144
      %980 = vsyncadd [#allocation3], %s979
      %s981 = sshll.u32 [#allocation2], 4
      %s982 = int_to_ptr.vmem [resolvable:$true] %s981
      %987 = dma.vmem_to_hbm [thread:$0]  %s982, 6144, %s3, [#allocation3], 256, 256, 16
    $region17: #{tpu_custom_call.1} parent=1 // pred_fallthru
      _
    // Predicated region
    $region18: #{tpu_custom_call.1} parent=1 // pred_check
      _
    $region19: #{tpu_custom_call.1} parent=1 // pred_check_branch
      %989 = sbr.rel (0) target = $region21
    $region20: #{tpu_custom_call.1} parent=1 // pred_region
      %990 = dma.done [#allocation3], 6144
    $region21: #{tpu_custom_call.1} parent=1 // pred_fallthru
      _
    %991 = vsyncpa [#allocation3], 1

</llo_original>
